<compile_context>
chip_gen: v5e
topology: v5e:2x2
jax: 0.10.0
libtpu: 0.0.40
codegen_flags: <defaults>
</compile_context>

<pallas_src>
import functools

import jax
import jax.numpy as jnp
from jax.experimental import pallas as pl
from jax.experimental.pallas import tpu as pltpu

_LANES = 128           # vreg lane width
_MAX_TILE_ROWS = 1024  # 1024 * 128 * 4B = 512 KiB per f32 tile


def _structure_kernel(s_ref, o_ref):
    # Identity read-out of the parameter: the whole "forward pass" of the
    # module is just accessing the parameter tensor.
    o_ref[...] = s_ref[...]


@functools.partial(jax.jit, static_argnames=())
def structure_forward(structure: jax.Array) -> jax.Array:
    """Materialize the `structure` parameter through a lane-dense Pallas copy."""
    orig_shape = structure.shape
    dtype = structure.dtype
    total = structure.size
    itemsize = jnp.dtype(dtype).itemsize

    # --- lane-dense view: flatten and pad to a (rows, 128) slab -------------
    rows = pl.cdiv(total, _LANES)
    # Tile rows: multiple of 8 (sublane), capped at _MAX_TILE_ROWS.
    tile_rows = min(_MAX_TILE_ROWS, pl.cdiv(rows, 8) * 8)
    padded_rows = pl.cdiv(rows, tile_rows) * tile_rows
    padded_total = padded_rows * _LANES

    flat = structure.reshape(-1)
    flat = jnp.pad(flat, (0, padded_total - total))
    x2d = flat.reshape(padded_rows, _LANES)

    grid = (padded_rows // tile_rows,)

    out2d = pl.pallas_call(
        _structure_kernel,
        out_shape=jax.ShapeDtypeStruct((padded_rows, _LANES), dtype),
        grid=grid,
        in_specs=[pl.BlockSpec((tile_rows, _LANES), lambda i: (i, 0))],
        out_specs=pl.BlockSpec((tile_rows, _LANES), lambda i: (i, 0)),
        # The output aliases the lane-dense input slab: no second HBM buffer,
        # no extra writeback allocation for the identity path.
        input_output_aliases={0: 0},
        compiler_params=pltpu.CompilerParams(
            dimension_semantics=("parallel",),
        ),
        cost_estimate=pl.CostEstimate(
            flops=0,
            transcendentals=0,
            bytes_accessed=2 * padded_total * itemsize,
        ),
    )(x2d)

    # --- restore the original (N, 3) layout ---------------------------------
    return out2d.reshape(-1)[:total].reshape(orig_shape)


class StructureModule:
    """JAX counterpart of the PyTorch `_Structure` module."""

    def __init__(self, structure: jax.Array):
        self._structure = structure

    def forward(self) -> jax.Array:
        return structure_forward(self._structure)

    @property
    def structure(self) -> jax.Array:
        return self._structure


if __name__ == "__main__":
    # Deterministic synthetic parameter: a small MD structure of 16 atoms
    # with xyz coordinates.
    key = jax.random.PRNGKey(0)
    structure_param = jax.random.normal(key, (16, 3), dtype=jnp.float32)

    module = StructureModule(structure_param)
    out = module.forward()
    out = jax.block_until_ready(out)

    # Sanity check: kernel output must equal the parameter exactly.
    assert out.shape == structure_param.shape
    assert out.dtype == structure_param.dtype
    assert bool(jnp.all(out == structure_param))

    print("KERNEL_OK")
</pallas_src>

<mosaic_0001>
module attributes {stable_mosaic.version = 11 : i64} {
  func.func @_structure_kernel(%arg0: i32, %arg1: memref<8x128xf32, #tpu.memory_space<vmem>>, %arg2: memref<8x128xf32, #tpu.memory_space<vmem>>) attributes {dimension_semantics = [#tpu.dimension_semantics<parallel>], iteration_bounds = array<i64: 1>, scalar_prefetch = 0 : i64, scratch_operands = 0 : i64, tpu.core_type = #tpu.core_type<tc>, window_params = [{transform_indices = @transform_0, window_bounds = array<i64: 8, 128>}, {transform_indices = @transform_1, window_bounds = array<i64: 8, 128>}]} {
    %c0 = arith.constant 0 : index
    %c0_0 = arith.constant 0 : index
    %0 = vector.load %arg1[%c0, %c0_0] : memref<8x128xf32, #tpu.memory_space<vmem>>, vector<8x128xf32>
    %c0_1 = arith.constant 0 : index
    %c0_2 = arith.constant 0 : index
    %1 = vector.load %arg2[%c0_1, %c0_2] : memref<8x128xf32, #tpu.memory_space<vmem>>, vector<8x128xf32>
    tpu.vector_store %arg2[%c0_1, %c0_2], %0 {strides = array<i32>} : memref<8x128xf32, #tpu.memory_space<vmem>>, vector<8x128xf32>,
    return
  }
  func.func @transform_0(%arg0: i32) -> (i32, i32) {
    %c0_i32 = arith.constant 0 : i32
    %c0_i32_0 = arith.constant 0 : i32
    return %arg0, %c0_i32 : i32, i32
  }
  func.func @transform_1(%arg0: i32) -> (i32, i32) {
    %c0_i32 = arith.constant 0 : i32
    %c0_i32_0 = arith.constant 0 : i32
    return %arg0, %c0_i32 : i32, i32
  }
}

</mosaic_0001>

<llo_original>
// kernel: structure_forward.1
$region0: #{structure_forward.1}
  #allocation0 [shape = 'u32[]', space=smem, size = 0x4, offset = 0x4, fixed_abs, tag = 'smem constant byte address 0x4 - core index']
  #allocation1 [shape = 'u32[72,128]{1,0:T(1,128)}', space=vmem, size = 0x9000, scoped, tag = 'internal scratch']
  %s0 = inlined_call_operand.vmem [shape: f32[8,128], index: 0, kind: input, shape index: {}, may-alias: {0,1}]
  %s1 = inlined_call_operand.vmem [shape: f32[8,128], index: 1, kind: output, shape index: {}, may-alias: {0,1}]
  %s2 = sld [smem:[#allocation0]]
  $region14: #{structure_forward.1} parent=0
    _
  %s4 = ssub.s32 1, %s2
  %s5 = scalar_select 0, %s4, %s2
  // Predicated region
  $region2: #{structure_forward.1} parent=0 // pred_check
    _
  $region3: #{structure_forward.1} parent=0 // pred_check_branch
    %7 = sbr.rel (0) target = $region5
  $region4: #{structure_forward.1} parent=0 // pred_region
    _
  $region5: #{structure_forward.1} parent=0 // pred_fallthru
    _
  %v8 = vld [vmem:[%s0] sm:$0xff]
  %9 = vst [vmem:[%s1] sm:$0xff] %v8
  // Predicated region
  $region6: #{structure_forward.1} parent=0 // pred_check
    _
  $region7: #{structure_forward.1} parent=0 // pred_check_branch
    %11 = sbr.rel (0) target = $region9
  $region8: #{structure_forward.1} parent=0 // pred_region
    _
  $region9: #{structure_forward.1} parent=0 // pred_fallthru
    _
  // Predicated region
  $region10: #{structure_forward.1} parent=0 // pred_check
    _
  $region11: #{structure_forward.1} parent=0 // pred_check_branch
    %13 = sbr.rel (0) target = $region13
  $region12: #{structure_forward.1} parent=0 // pred_region
    _
  $region13: #{structure_forward.1} parent=0 // pred_fallthru
    _

</llo_original>
